<compile_context>
chip_gen: v5e
topology: v5e:2x2
jax: 0.10.0
libtpu: 0.0.40
codegen_flags: <defaults>
</compile_context>

<pallas_src>
import functools

import jax
import jax.numpy as jnp
from jax.experimental import pallas as pl
from jax.experimental.pallas import tpu as pltpu

EPS = 1e-5            # PyTorch BatchNorm1d default eps
LANE = 128            # TPU lane width

# bf16 weights / matmul inputs: native MXU dtype on v6e/v7x, halves weight DMA
# bytes on v5e.  Accumulation stays f32 (preferred_element_type).  Set to
# jnp.float32 for bit-for-bit parity with the PyTorch module.
MATMUL_DTYPE = jnp.bfloat16


def _round_up(n, m):
    return ((n + m - 1) // m) * m


def _pad_to(a, shape):
    pads = [(0, t - s) for s, t in zip(a.shape, shape)]
    if all(p == (0, 0) for p in pads):
        return a
    return jnp.pad(a, pads)


def _fused_dnn_kernel(*refs, n_layers):
    """Whole network: [BN -> ReLU -> Linear] x (L-1), then BN(no affine) -> Linear.

    refs = (x_ref, (gb, w, b) * n_layers, out_ref).
      gb : (2, Dp_in)  f32  -- row 0 = gamma, row 1 = beta
      w  : (Dp_in, Dp_out)  MATMUL_DTYPE
      b  : (1, Dp_out) f32
    All feature widths are zero-padded to multiples of 128 (lane-dense); the
    zero padding is mathematically inert (scale=0 on padded cols, zero rows of
    w contribute nothing).
    """
    x_ref = refs[0]
    out_ref = refs[-1]
    p_refs = refs[1:-1]

    x = x_ref[...]                                     # (N, Dp0) f32
    for i in range(n_layers):                          # static unroll
        gb = p_refs[3 * i][...]                        # (2, Dp_in) f32
        w = p_refs[3 * i + 1][...]                     # (Dp_in, Dp_out) bf16
        b = p_refs[3 * i + 2][...]                     # (1, Dp_out) f32
        gamma = gb[0:1, :]
        beta = gb[1:2, :]

        # Training-mode BatchNorm1d: biased batch stats, single pass over x.
        mean = jnp.mean(x, axis=0, keepdims=True)
        mean_sq = jnp.mean(x * x, axis=0, keepdims=True)
        var = jnp.maximum(mean_sq - mean * mean, 0.0)  # clamp cancellation
        inv_std = jax.lax.rsqrt(var + EPS)             # EUP slot
        scale = gamma * inv_std                        # (1, Dp_in)
        shift = beta - mean * scale                    # (1, Dp_in)
        xhat = x * scale + shift                       # 2 VALU ops / element
        if i != n_layers - 1:
            xhat = jnp.maximum(xhat, 0.0)              # ReLU (not on last layer)

        # Linear on the MXU; f32 accumulate, f32 bias add.
        x = jnp.dot(xhat.astype(w.dtype), w,
                    preferred_element_type=jnp.float32) + b

    out_ref[...] = x.astype(out_ref.dtype)


def prepare_dnn_params(params, d_in):
    """One-time padding + casting of parameters (amortized across forwards)."""
    dims = [d_in] + [p["w"].shape[1] for p in params]
    pdims = [_round_up(d, LANE) for d in dims]
    prepped = []
    for i, p in enumerate(params):
        dp_in, dp_out = pdims[i], pdims[i + 1]
        gb = jnp.stack([p["gamma"], p["beta"]], axis=0).astype(jnp.float32)
        gb = _pad_to(gb, (2, dp_in))
        w = _pad_to(p["w"].astype(MATMUL_DTYPE), (dp_in, dp_out))
        b = _pad_to(p["b"].reshape(1, -1).astype(jnp.float32), (1, dp_out))
        prepped.append((gb, w, b))
    return tuple(prepped), dims[-1]


@functools.partial(jax.jit, static_argnames=("out_dim",))
def dnn_forward(x, prepped, out_dim):
    """Single-dispatch fused forward.  `prepped` comes from prepare_dnn_params."""
    n = x.shape[0]
    n_layers = len(prepped)
    dp0 = prepped[0][0].shape[1]
    dp_out = prepped[-1][1].shape[1]

    x_p = _pad_to(x.astype(jnp.float32), (n, dp0))     # only per-call pad

    flat_inputs = [x_p]
    for gb, w, b in prepped:
        flat_inputs.extend((gb, w, b))

    # VMEM budget: everything resident (no grid) -> inputs + output + a few
    # f32 activation temporaries, with generous headroom, capped for v7x's
    # 64 MiB per-TC VMEM.
    max_pd = max([dp0] + [w.shape[1] for _, w, _ in prepped])
    footprint = sum(int(a.size) * a.dtype.itemsize for a in flat_inputs)
    footprint += n * dp_out * 4                         # padded output
    footprint += 4 * n * max_pd * 4                     # per-layer temporaries
    vmem_limit = int(min(max(3 * footprint, 8 * 1024 * 1024), 64 * 1024 * 1024))

    kernel = functools.partial(_fused_dnn_kernel, n_layers=n_layers)
    vmem = pl.BlockSpec(memory_space=pltpu.MemorySpace.VMEM)
    out_padded = pl.pallas_call(
        kernel,
        out_shape=jax.ShapeDtypeStruct((n, dp_out), jnp.float32),
        in_specs=[vmem] * len(flat_inputs),
        out_specs=vmem,
        compiler_params=pltpu.CompilerParams(vmem_limit_bytes=vmem_limit),
    )(*flat_inputs)

    if out_dim == dp_out:                               # already lane-aligned
        return out_padded
    return out_padded[:, :out_dim]


def init_dnn_params(key, layers):
    """Deterministic init mirroring the PyTorch module's parameter shapes."""
    params = []
    n_layers = len(layers) - 1
    for i in range(n_layers):
        d_in, d_out = layers[i], layers[i + 1]
        key, kw, kb = jax.random.split(key, 3)
        bound = 1.0 / jnp.sqrt(jnp.float32(d_in))
        # nn.Linear default init: U(-1/sqrt(fan_in), 1/sqrt(fan_in)).
        w = jax.random.uniform(kw, (d_in, d_out), jnp.float32, -bound, bound)
        b = jax.random.uniform(kb, (d_out,), jnp.float32, -bound, bound)
        # nn.BatchNorm1d affine init: gamma=1, beta=0.  Last layer has
        # affine=False, numerically identical to gamma=1, beta=0.
        gamma = jnp.ones((d_in,), jnp.float32)
        beta = jnp.zeros((d_in,), jnp.float32)
        params.append({"w": w, "b": b, "gamma": gamma, "beta": beta})
    return params


def dnn_forward_ref(x, params, matmul_dtype=jnp.float32):
    """Pure-JAX reference (training-mode BN), optionally matching matmul dtype."""
    n_layers = len(params)
    for i, p in enumerate(params):
        mean = jnp.mean(x, axis=0, keepdims=True)
        var = jnp.mean((x - mean) ** 2, axis=0, keepdims=True)
        xhat = (x - mean) / jnp.sqrt(var + EPS)
        xhat = xhat * p["gamma"][None, :] + p["beta"][None, :]
        if i != n_layers - 1:
            xhat = jnp.maximum(xhat, 0.0)
        x = jnp.dot(xhat.astype(matmul_dtype), p["w"].astype(matmul_dtype),
                    preferred_element_type=jnp.float32) + p["b"][None, :]
    return x


if __name__ == "__main__":
    # DNN(layers=[16, 32, 24, 8]) on a batch of 8 samples.
    layers = [16, 32, 24, 8]
    batch = 8

    key = jax.random.PRNGKey(0)
    key, kx, kp = jax.random.split(key, 3)
    x = jax.random.normal(kx, (batch, layers[0]), jnp.float32)
    params = init_dnn_params(kp, layers)

    prepped, out_dim = prepare_dnn_params(params, layers[0])

    out = dnn_forward(x, prepped, out_dim)
    out = jax.block_until_ready(out)
    assert out.shape == (batch, layers[-1])

    # (1) Tight check against a matched-precision pure-JAX reference
    #     (isolates kernel bugs from bf16 quantization).
    ref_mm = dnn_forward_ref(x, params, MATMUL_DTYPE)
    # (2) Loose check against the original f32 semantics of the PyTorch module.
    ref_f32 = dnn_forward_ref(x, params, jnp.float32)

    if jnp.dtype(MATMUL_DTYPE) == jnp.dtype(jnp.float32):
        tol_mm, tol_sem = 1e-4, 1e-4
    else:
        tol_mm, tol_sem = 2e-2, 1e-1

    assert jnp.allclose(out, ref_mm, atol=tol_mm, rtol=tol_mm), \
        "mismatch vs matched-precision reference"
    assert jnp.allclose(out, ref_f32, atol=tol_sem, rtol=tol_sem), \
        "mismatch vs f32 (original-semantics) reference"

    print("KERNEL_OK")
</pallas_src>

<mosaic_0001>
module attributes {stable_mosaic.version = 11 : i64} {
  func.func @_fused_dnn_kernel(%arg0: memref<8x128xf32, #tpu.memory_space<vmem>>, %arg1: memref<2x128xf32, #tpu.memory_space<vmem>>, %arg2: memref<128x128xbf16, #tpu.memory_space<vmem>>, %arg3: memref<1x128xf32, #tpu.memory_space<vmem>>, %arg4: memref<2x128xf32, #tpu.memory_space<vmem>>, %arg5: memref<128x128xbf16, #tpu.memory_space<vmem>>, %arg6: memref<1x128xf32, #tpu.memory_space<vmem>>, %arg7: memref<2x128xf32, #tpu.memory_space<vmem>>, %arg8: memref<128x128xbf16, #tpu.memory_space<vmem>>, %arg9: memref<1x128xf32, #tpu.memory_space<vmem>>, %arg10: memref<8x128xf32, #tpu.memory_space<vmem>>) attributes {dimension_semantics = [], scalar_prefetch = 0 : i64, scratch_operands = 0 : i64, tpu.core_type = #tpu.core_type<tc>} {
    %c0 = arith.constant 0 : index
    %c0_0 = arith.constant 0 : index
    %0 = vector.load %arg0[%c0, %c0_0] : memref<8x128xf32, #tpu.memory_space<vmem>>, vector<8x128xf32>
    %c0_1 = arith.constant 0 : index
    %c0_2 = arith.constant 0 : index
    %1 = vector.load %arg1[%c0_1, %c0_2] : memref<2x128xf32, #tpu.memory_space<vmem>>, vector<2x128xf32>
    %c0_3 = arith.constant 0 : index
    %c0_4 = arith.constant 0 : index
    %2 = vector.load %arg2[%c0_3, %c0_4] : memref<128x128xbf16, #tpu.memory_space<vmem>>, vector<128x128xbf16>
    %c0_5 = arith.constant 0 : index
    %c0_6 = arith.constant 0 : index
    %3 = vector.load %arg3[%c0_5, %c0_6] : memref<1x128xf32, #tpu.memory_space<vmem>>, vector<1x128xf32>
    %4 = vector.extract_strided_slice %1 {offsets = [0, 0], sizes = [1, 128], strides = [1, 1]} : vector<2x128xf32> to vector<1x128xf32>
    %5 = vector.extract_strided_slice %1 {offsets = [1, 0], sizes = [1, 128], strides = [1, 1]} : vector<2x128xf32> to vector<1x128xf32>
    %cst = arith.constant dense<0.000000e+00> : vector<128xf32>
    %6 = vector.multi_reduction <add>, %0, %cst [0] : vector<8x128xf32> to vector<128xf32>
    %7 = vector.shape_cast %6 : vector<128xf32> to vector<1x128xf32>
    %cst_7 = arith.constant 8.000000e+00 : f32
    %8 = vector.broadcast %cst_7 : f32 to vector<1x128xf32>
    %9 = arith.divf %7, %8 : vector<1x128xf32>
    %10 = arith.mulf %0, %0 : vector<8x128xf32>
    %cst_8 = arith.constant dense<0.000000e+00> : vector<128xf32>
    %11 = vector.multi_reduction <add>, %10, %cst_8 [0] : vector<8x128xf32> to vector<128xf32>
    %12 = vector.shape_cast %11 : vector<128xf32> to vector<1x128xf32>
    %cst_9 = arith.constant 8.000000e+00 : f32
    %13 = vector.broadcast %cst_9 : f32 to vector<1x128xf32>
    %14 = arith.divf %12, %13 : vector<1x128xf32>
    %15 = arith.mulf %9, %9 : vector<1x128xf32>
    %16 = arith.subf %14, %15 : vector<1x128xf32>
    %cst_10 = arith.constant 0.000000e+00 : f32
    %17 = vector.broadcast %cst_10 : f32 to vector<1x128xf32>
    %18 = arith.maximumf %16, %17 : vector<1x128xf32>
    %cst_11 = arith.constant 9.99999974E-6 : f32
    %19 = vector.broadcast %cst_11 : f32 to vector<1x128xf32>
    %20 = arith.addf %18, %19 : vector<1x128xf32>
    %21 = math.rsqrt %20 : vector<1x128xf32>
    %22 = arith.mulf %4, %21 : vector<1x128xf32>
    %23 = arith.mulf %9, %22 : vector<1x128xf32>
    %24 = arith.subf %5, %23 : vector<1x128xf32>
    %25 = vector.broadcast %22 : vector<1x128xf32> to vector<8x128xf32>
    %26 = arith.mulf %0, %25 : vector<8x128xf32>
    %27 = vector.broadcast %24 : vector<1x128xf32> to vector<8x128xf32>
    %28 = arith.addf %26, %27 : vector<8x128xf32>
    %cst_12 = arith.constant 0.000000e+00 : f32
    %29 = vector.broadcast %cst_12 : f32 to vector<8x128xf32>
    %30 = arith.maximumf %28, %29 : vector<8x128xf32>
    %31 = arith.truncf %30 : vector<8x128xf32> to vector<8x128xbf16>
    %cst_13 = arith.constant dense<0.000000e+00> : vector<8x128xf32>
    %32 = tpu.matmul %31, %2, %cst_13 {dimension_numbers = #tpu.dot_dimension_numbers<[1], [0], [0], [1], [0, 0, 1, 1], [], []>} : vector<8x128xbf16>, vector<128x128xbf16>, vector<8x128xf32> -> vector<8x128xf32>
    %33 = vector.broadcast %3 : vector<1x128xf32> to vector<8x128xf32>
    %34 = arith.addf %32, %33 : vector<8x128xf32>
    %c0_14 = arith.constant 0 : index
    %c0_15 = arith.constant 0 : index
    %35 = vector.load %arg4[%c0_14, %c0_15] : memref<2x128xf32, #tpu.memory_space<vmem>>, vector<2x128xf32>
    %c0_16 = arith.constant 0 : index
    %c0_17 = arith.constant 0 : index
    %36 = vector.load %arg5[%c0_16, %c0_17] : memref<128x128xbf16, #tpu.memory_space<vmem>>, vector<128x128xbf16>
    %c0_18 = arith.constant 0 : index
    %c0_19 = arith.constant 0 : index
    %37 = vector.load %arg6[%c0_18, %c0_19] : memref<1x128xf32, #tpu.memory_space<vmem>>, vector<1x128xf32>
    %38 = vector.extract_strided_slice %35 {offsets = [0, 0], sizes = [1, 128], strides = [1, 1]} : vector<2x128xf32> to vector<1x128xf32>
    %39 = vector.extract_strided_slice %35 {offsets = [1, 0], sizes = [1, 128], strides = [1, 1]} : vector<2x128xf32> to vector<1x128xf32>
    %cst_20 = arith.constant dense<0.000000e+00> : vector<128xf32>
    %40 = vector.multi_reduction <add>, %34, %cst_20 [0] : vector<8x128xf32> to vector<128xf32>
    %41 = vector.shape_cast %40 : vector<128xf32> to vector<1x128xf32>
    %cst_21 = arith.constant 8.000000e+00 : f32
    %42 = vector.broadcast %cst_21 : f32 to vector<1x128xf32>
    %43 = arith.divf %41, %42 : vector<1x128xf32>
    %44 = arith.mulf %34, %34 : vector<8x128xf32>
    %cst_22 = arith.constant dense<0.000000e+00> : vector<128xf32>
    %45 = vector.multi_reduction <add>, %44, %cst_22 [0] : vector<8x128xf32> to vector<128xf32>
    %46 = vector.shape_cast %45 : vector<128xf32> to vector<1x128xf32>
    %cst_23 = arith.constant 8.000000e+00 : f32
    %47 = vector.broadcast %cst_23 : f32 to vector<1x128xf32>
    %48 = arith.divf %46, %47 : vector<1x128xf32>
    %49 = arith.mulf %43, %43 : vector<1x128xf32>
    %50 = arith.subf %48, %49 : vector<1x128xf32>
    %cst_24 = arith.constant 0.000000e+00 : f32
    %51 = vector.broadcast %cst_24 : f32 to vector<1x128xf32>
    %52 = arith.maximumf %50, %51 : vector<1x128xf32>
    %cst_25 = arith.constant 9.99999974E-6 : f32
    %53 = vector.broadcast %cst_25 : f32 to vector<1x128xf32>
    %54 = arith.addf %52, %53 : vector<1x128xf32>
    %55 = math.rsqrt %54 : vector<1x128xf32>
    %56 = arith.mulf %38, %55 : vector<1x128xf32>
    %57 = arith.mulf %43, %56 : vector<1x128xf32>
    %58 = arith.subf %39, %57 : vector<1x128xf32>
    %59 = vector.broadcast %56 : vector<1x128xf32> to vector<8x128xf32>
    %60 = arith.mulf %34, %59 : vector<8x128xf32>
    %61 = vector.broadcast %58 : vector<1x128xf32> to vector<8x128xf32>
    %62 = arith.addf %60, %61 : vector<8x128xf32>
    %cst_26 = arith.constant 0.000000e+00 : f32
    %63 = vector.broadcast %cst_26 : f32 to vector<8x128xf32>
    %64 = arith.maximumf %62, %63 : vector<8x128xf32>
    %65 = arith.truncf %64 : vector<8x128xf32> to vector<8x128xbf16>
    %cst_27 = arith.constant dense<0.000000e+00> : vector<8x128xf32>
    %66 = tpu.matmul %65, %36, %cst_27 {dimension_numbers = #tpu.dot_dimension_numbers<[1], [0], [0], [1], [0, 0, 1, 1], [], []>} : vector<8x128xbf16>, vector<128x128xbf16>, vector<8x128xf32> -> vector<8x128xf32>
    %67 = vector.broadcast %37 : vector<1x128xf32> to vector<8x128xf32>
    %68 = arith.addf %66, %67 : vector<8x128xf32>
    %c0_28 = arith.constant 0 : index
    %c0_29 = arith.constant 0 : index
    %69 = vector.load %arg7[%c0_28, %c0_29] : memref<2x128xf32, #tpu.memory_space<vmem>>, vector<2x128xf32>
    %c0_30 = arith.constant 0 : index
    %c0_31 = arith.constant 0 : index
    %70 = vector.load %arg8[%c0_30, %c0_31] : memref<128x128xbf16, #tpu.memory_space<vmem>>, vector<128x128xbf16>
    %c0_32 = arith.constant 0 : index
    %c0_33 = arith.constant 0 : index
    %71 = vector.load %arg9[%c0_32, %c0_33] : memref<1x128xf32, #tpu.memory_space<vmem>>, vector<1x128xf32>
    %72 = vector.extract_strided_slice %69 {offsets = [0, 0], sizes = [1, 128], strides = [1, 1]} : vector<2x128xf32> to vector<1x128xf32>
    %73 = vector.extract_strided_slice %69 {offsets = [1, 0], sizes = [1, 128], strides = [1, 1]} : vector<2x128xf32> to vector<1x128xf32>
    %cst_34 = arith.constant dense<0.000000e+00> : vector<128xf32>
    %74 = vector.multi_reduction <add>, %68, %cst_34 [0] : vector<8x128xf32> to vector<128xf32>
    %75 = vector.shape_cast %74 : vector<128xf32> to vector<1x128xf32>
    %cst_35 = arith.constant 8.000000e+00 : f32
    %76 = vector.broadcast %cst_35 : f32 to vector<1x128xf32>
    %77 = arith.divf %75, %76 : vector<1x128xf32>
    %78 = arith.mulf %68, %68 : vector<8x128xf32>
    %cst_36 = arith.constant dense<0.000000e+00> : vector<128xf32>
    %79 = vector.multi_reduction <add>, %78, %cst_36 [0] : vector<8x128xf32> to vector<128xf32>
    %80 = vector.shape_cast %79 : vector<128xf32> to vector<1x128xf32>
    %cst_37 = arith.constant 8.000000e+00 : f32
    %81 = vector.broadcast %cst_37 : f32 to vector<1x128xf32>
    %82 = arith.divf %80, %81 : vector<1x128xf32>
    %83 = arith.mulf %77, %77 : vector<1x128xf32>
    %84 = arith.subf %82, %83 : vector<1x128xf32>
    %cst_38 = arith.constant 0.000000e+00 : f32
    %85 = vector.broadcast %cst_38 : f32 to vector<1x128xf32>
    %86 = arith.maximumf %84, %85 : vector<1x128xf32>
    %cst_39 = arith.constant 9.99999974E-6 : f32
    %87 = vector.broadcast %cst_39 : f32 to vector<1x128xf32>
    %88 = arith.addf %86, %87 : vector<1x128xf32>
    %89 = math.rsqrt %88 : vector<1x128xf32>
    %90 = arith.mulf %72, %89 : vector<1x128xf32>
    %91 = arith.mulf %77, %90 : vector<1x128xf32>
    %92 = arith.subf %73, %91 : vector<1x128xf32>
    %93 = vector.broadcast %90 : vector<1x128xf32> to vector<8x128xf32>
    %94 = arith.mulf %68, %93 : vector<8x128xf32>
    %95 = vector.broadcast %92 : vector<1x128xf32> to vector<8x128xf32>
    %96 = arith.addf %94, %95 : vector<8x128xf32>
    %97 = arith.truncf %96 : vector<8x128xf32> to vector<8x128xbf16>
    %cst_40 = arith.constant dense<0.000000e+00> : vector<8x128xf32>
    %98 = tpu.matmul %97, %70, %cst_40 {dimension_numbers = #tpu.dot_dimension_numbers<[1], [0], [0], [1], [0, 0, 1, 1], [], []>} : vector<8x128xbf16>, vector<128x128xbf16>, vector<8x128xf32> -> vector<8x128xf32>
    %99 = vector.broadcast %71 : vector<1x128xf32> to vector<8x128xf32>
    %100 = arith.addf %98, %99 : vector<8x128xf32>
    %c0_41 = arith.constant 0 : index
    %c0_42 = arith.constant 0 : index
    %101 = vector.load %arg10[%c0_41, %c0_42] : memref<8x128xf32, #tpu.memory_space<vmem>>, vector<8x128xf32>
    tpu.vector_store %arg10[%c0_41, %c0_42], %100 {strides = array<i32>} : memref<8x128xf32, #tpu.memory_space<vmem>>, vector<8x128xf32>,
    return
  }
}

</mosaic_0001>

<llo_original>
// kernel: dnn_forward.1
$region0: #{dnn_forward.1}
  #allocation0 [shape = 'u32[]', space=smem, size = 0x4, offset = 0x4, fixed_abs, tag = 'smem constant byte address 0x4 - core index']
  #allocation1 [shape = 'u32[72,128]{1,0:T(1,128)}', space=vmem, size = 0x9000, scoped, tag = 'internal scratch']
  %s0 = inlined_call_operand.vmem [shape: f32[8,128], index: 0, kind: input, shape index: {}]
  %s1 = inlined_call_operand.vmem [shape: f32[2,128], index: 1, kind: input, shape index: {}]
  %s2 = inlined_call_operand.hbm [shape: bf16[128,128], index: 2, kind: input, shape index: {}]
  %s3 = inlined_call_operand.vmem [shape: f32[1,128], index: 3, kind: input, shape index: {}]
  %s4 = inlined_call_operand.vmem [shape: f32[2,128], index: 4, kind: input, shape index: {}]
  %s5 = inlined_call_operand.hbm [shape: bf16[128,128], index: 5, kind: input, shape index: {}]
  %s6 = inlined_call_operand.vmem [shape: f32[1,128], index: 6, kind: input, shape index: {}]
  %s7 = inlined_call_operand.vmem [shape: f32[2,128], index: 7, kind: input, shape index: {}]
  %s8 = inlined_call_operand.hbm [shape: bf16[128,128], index: 8, kind: input, shape index: {}]
  %s9 = inlined_call_operand.vmem [shape: f32[1,128], index: 9, kind: input, shape index: {}]
  %s10 = inlined_call_operand.hbm [shape: f32[8,128], index: 10, kind: output, shape index: {}]
  %s11 = sld [smem:[#allocation0]]
  $region62: #{dnn_forward.1} parent=0
    _
  %s13 = ssub.s32 1, %s11
  %s14 = scalar_select 0, %s13, %s11
  $region1: #{dnn_forward.1} parent=0
    #allocation2 [shape = 'u8[32768]{0}', space=vmem, size = 0x8000, scoped, tag = 'input window, operand 2, single buffered']
    #allocation3 [shape = 's32[1]{0}', space=sflag, size = 0x4, scoped, tag = 'scoped memory for dnn_forward.1']
    #allocation4 [shape = 's32[1]{0}', space=sflag, size = 0x4, scoped, tag = 'scoped memory for dnn_forward.1']
    #allocation5 [shape = 'u8[32768]{0}', space=vmem, size = 0x8000, scoped, tag = 'input window, operand 5, single buffered']
    #allocation6 [shape = 's32[1]{0}', space=sflag, size = 0x4, scoped, tag = 'scoped memory for dnn_forward.1']
    #allocation7 [shape = 'u8[32768]{0}', space=vmem, size = 0x8000, scoped, tag = 'input window, operand 8, single buffered']
    #allocation8 [shape = 'u8[4096]{0}', space=vmem, size = 0x1000, scoped, tag = 'output window, operand 0, single buffered']
    %15 = vsyncpa [#allocation3], 0
    %16 = vsyncpa [#allocation6], 0
    %17 = vsyncpa [#allocation4], 0
    // Predicated region
    $region2: #{dnn_forward.1} parent=1 // pred_check
      _
    $region3: #{dnn_forward.1} parent=1 // pred_check_branch
      %19 = sbr.rel (0) target = $region5
    $region4: #{dnn_forward.1} parent=1 // pred_region
      _
    $region5: #{dnn_forward.1} parent=1 // pred_fallthru
      _
    // Predicated region
    $region6: #{dnn_forward.1} parent=1 // pred_check
      _
    $region7: #{dnn_forward.1} parent=1 // pred_check_branch
      %21 = sbr.rel (0) target = $region9
    $region8: #{dnn_forward.1} parent=1 // pred_region
      _
    $region9: #{dnn_forward.1} parent=1 // pred_fallthru
      _
    // Predicated region
    $region10: #{dnn_forward.1} parent=1 // pred_check
      _
    $region11: #{dnn_forward.1} parent=1 // pred_check_branch
      %23 = sbr.rel (0) target = $region13
    $region12: #{dnn_forward.1} parent=1 // pred_region
      %25 = vsyncadd [#allocation3], 0
      %s26 = sshll.u32 %s2, 4
      %s27 = int_to_ptr.hbm [resolvable:$true] %s26
      %s28 = sshll.u32 [#allocation2], 4
      %s29 = int_to_ptr.vmem [resolvable:$true] %s28
      %34 = dma.hbm_to_vmem [thread:$0]  %s27, 1024, %s29, [#allocation3], 64, 64, 4
    $region13: #{dnn_forward.1} parent=1 // pred_fallthru
      _
    // Predicated region
    $region14: #{dnn_forward.1} parent=1 // pred_check
      _
    $region15: #{dnn_forward.1} parent=1 // pred_check_branch
      %36 = sbr.rel (0) target = $region17
    $region16: #{dnn_forward.1} parent=1 // pred_region
      _
    $region17: #{dnn_forward.1} parent=1 // pred_fallthru
      _
    // Predicated region
    $region18: #{dnn_forward.1} parent=1 // pred_check
      _
    $region19: #{dnn_forward.1} parent=1 // pred_check_branch
      %38 = sbr.rel (0) target = $region21
    $region20: #{dnn_forward.1} parent=1 // pred_region
      _
    $region21: #{dnn_forward.1} parent=1 // pred_fallthru
      _
    // Predicated region
    $region22: #{dnn_forward.1} parent=1 // pred_check
      _
    $region23: #{dnn_forward.1} parent=1 // pred_check_branch
      %40 = sbr.rel (0) target = $region25
    $region24: #{dnn_forward.1} parent=1 // pred_region
      %42 = vsyncadd [#allocation6], 0
      %s43 = sshll.u32 %s5, 4
      %s44 = int_to_ptr.hbm [resolvable:$true] %s43
      %s45 = sshll.u32 [#allocation5], 4
      %s46 = int_to_ptr.vmem [resolvable:$true] %s45
      %51 = dma.hbm_to_vmem [thread:$0]  %s44, 1024, %s46, [#allocation6], 64, 64, 4
    $region25: #{dnn_forward.1} parent=1 // pred_fallthru
      _
    // Predicated region
    $region26: #{dnn_forward.1} parent=1 // pred_check
      _
    $region27: #{dnn_forward.1} parent=1 // pred_check_branch
      %53 = sbr.rel (0) target = $region29
    $region28: #{dnn_forward.1} parent=1 // pred_region
      _
    $region29: #{dnn_forward.1} parent=1 // pred_fallthru
      _
    // Predicated region
    $region30: #{dnn_forward.1} parent=1 // pred_check
      _
    $region31: #{dnn_forward.1} parent=1 // pred_check_branch
      %55 = sbr.rel (0) target = $region33
    $region32: #{dnn_forward.1} parent=1 // pred_region
      _
    $region33: #{dnn_forward.1} parent=1 // pred_fallthru
      _
    // Predicated region
    $region34: #{dnn_forward.1} parent=1 // pred_check
      _
    $region35: #{dnn_forward.1} parent=1 // pred_check_branch
      %57 = sbr.rel (0) target = $region37
    $region36: #{dnn_forward.1} parent=1 // pred_region
      %59 = vsyncadd [#allocation6], 0
      %s60 = sshll.u32 %s8, 4
      %s61 = int_to_ptr.hbm [resolvable:$true] %s60
      %s62 = sshll.u32 [#allocation7], 4
      %s63 = int_to_ptr.vmem [resolvable:$true] %s62
      %68 = dma.hbm_to_vmem [thread:$0]  %s61, 1024, %s63, [#allocation6], 64, 64, 4
    $region37: #{dnn_forward.1} parent=1 // pred_fallthru
      _
    // Predicated region
    $region38: #{dnn_forward.1} parent=1 // pred_check
      _
    $region39: #{dnn_forward.1} parent=1 // pred_check_branch
      %70 = sbr.rel (0) target = $region41
    $region40: #{dnn_forward.1} parent=1 // pred_region
      _
    $region41: #{dnn_forward.1} parent=1 // pred_fallthru
      _
    // Predicated region
    $region42: #{dnn_forward.1} parent=1 // pred_check
      _
    $region43: #{dnn_forward.1} parent=1 // pred_check_branch
      %72 = sbr.rel (0) target = $region45
    $region44: #{dnn_forward.1} parent=1 // pred_region
      %74 = dma.done [#allocation3], 1024
    $region45: #{dnn_forward.1} parent=1 // pred_fallthru
      _
    // Predicated region
    $region46: #{dnn_forward.1} parent=1 // pred_check
      _
    $region47: #{dnn_forward.1} parent=1 // pred_check_branch
      %76 = sbr.rel (0) target = $region49
    $region48: #{dnn_forward.1} parent=1 // pred_region
      %78 = dma.done [#allocation6], 1024
    $region49: #{dnn_forward.1} parent=1 // pred_fallthru
      _
    // Predicated region
    $region50: #{dnn_forward.1} parent=1 // pred_check
      _
    $region51: #{dnn_forward.1} parent=1 // pred_check_branch
      %80 = sbr.rel (0) target = $region53
    $region52: #{dnn_forward.1} parent=1 // pred_region
      %82 = dma.done [#allocation6], 1024
    $region53: #{dnn_forward.1} parent=1 // pred_fallthru
      _
    %v83 = vld [vmem:[%s0] sm:$0xff]
    %v84 = vld [vmem:[%s1] sm:$0x3]
    %v85 = vld [vmem:[#allocation2] sm:$0xf]
    %v86 = vld [vmem:[#allocation2 + $0x4] sm:$0xf]
    %v87 = vld [vmem:[#allocation2 + $0x8] sm:$0xf]
    %v88 = vld [vmem:[#allocation2 + $0xc] sm:$0xf]
    %v89 = vld [vmem:[#allocation2 + $0x10] sm:$0xf]
    %v90 = vld [vmem:[#allocation2 + $0x14] sm:$0xf]
    %v91 = vld [vmem:[#allocation2 + $0x18] sm:$0xf]
    %v92 = vld [vmem:[#allocation2 + $0x1c] sm:$0xf]
    %v93 = vld [vmem:[#allocation2 + $0x20] sm:$0xf]
    %v94 = vld [vmem:[#allocation2 + $0x24] sm:$0xf]
    %v95 = vld [vmem:[#allocation2 + $0x28] sm:$0xf]
    %v96 = vld [vmem:[#allocation2 + $0x2c] sm:$0xf]
    %v97 = vld [vmem:[#allocation2 + $0x30] sm:$0xf]
    %v98 = vld [vmem:[#allocation2 + $0x34] sm:$0xf]
    %v99 = vld [vmem:[#allocation2 + $0x38] sm:$0xf]
    %v100 = vld [vmem:[#allocation2 + $0x3c] sm:$0xf]
    %v101 = vld [vmem:[%s3] sm:$0x1]
    %v102 = vrot.slane %v83, 4
    %v103 = vadd.f32 %v83, %v102
    %v104 = vrot.slane %v103, 2
    %v105 = vadd.f32 %v103, %v104
    %v106 = vrot.slane %v105, 1
    %v107 = vadd.f32 %v105, %v106
    %v108 = vrcp.pop 8.0
    %v109 = vmul.f32 8.0, %v108
    %v110 = vsub.f32 1.0, %v109
    %v111 = vmul.f32 %v108, %v110
    %v112 = vadd.f32 %v108, %v111
    %vm113 = vweird.f32 %v108
    %v114 = vsel %vm113, %v108, %v112
    %v115 = vmul.f32 %v107, %v114
    %v116 = vmul.f32 %v83, %v83
    %v117 = vrot.slane %v116, 4
    %v118 = vadd.f32 %v116, %v117
    %v119 = vrot.slane %v118, 2
    %v120 = vadd.f32 %v118, %v119
    %v121 = vrot.slane %v120, 1
    %v122 = vadd.f32 %v120, %v121
    %v123 = vmul.f32 %v122, %v114
    %v124 = vmul.f32 %v115, %v115
    %v125 = vsub.f32 %v123, %v124
    %v126 = vmax.f32 %v125, 0.0
    %v127 = vadd.f32 %v126, 1e-05
    %v128 = vrsqrt.pop %v127
    %v129 = vmul.f32 %v128, %v127
    %v130 = vmul.f32 %v129, %v128
    %v131 = vmul.f32 0.5, %v130
    %v132 = vsub.f32 1.5, %v131
    %v133 = vmul.f32 %v128, %v132
    %vm134 = vweird.f32 %v127
    %vm135 = vweird.f32 %v128
    %vm136 = vmor %vm134, %vm135
    %v137 = vsel %vm136, %v128, %v133
    %v138 = vmul.f32 %v84, %v137
    %v139 = vmul.f32 %v115, %v138
    %v141 = vrot.slane %v139, 7
    %v143 = vsub.f32 %v84, %v141
    %v144 = vperm.slane %v138, 0
    %v145 = vmul.f32 %v83, %v144
    %v146 = vperm.slane %v143, 1
    %v147 = vadd.f32 %v145, %v146
    %v148 = vmax.f32 %v147, 0.0
    %v149 = vpack.c.bf16 %v148, %v148
    %v151 = vperm.slane %v101, 0
    %v169 = vunpack.c.l.b16 %v85
    %v170 = vunpack.c.l.b16 %v86
    %v171 = vunpack.c.l.b16 %v87
    %v172 = vunpack.c.l.b16 %v88
    %v173 = vunpack.c.l.b16 %v89
    %v174 = vunpack.c.l.b16 %v90
    %v175 = vunpack.c.l.b16 %v91
    %v176 = vunpack.c.l.b16 %v92
    %v177 = vunpack.c.l.b16 %v93
    %v178 = vunpack.c.l.b16 %v94
    %v179 = vunpack.c.l.b16 %v95
    %v180 = vunpack.c.l.b16 %v96
    %v181 = vunpack.c.l.b16 %v97
    %v182 = vunpack.c.l.b16 %v98
    %v183 = vunpack.c.l.b16 %v99
    %v184 = vunpack.c.l.b16 %v100
    %v185 = vpack.c.b16 %v170, %v169
    %v186 = vpack.c.b16 %v172, %v171
    %v187 = vpack.c.b16 %v174, %v173
    %v188 = vpack.c.b16 %v176, %v175
    %v189 = vpack.c.b16 %v178, %v177
    %v190 = vpack.c.b16 %v180, %v179
    %v191 = vpack.c.b16 %v182, %v181
    %v192 = vpack.c.b16 %v184, %v183
    %201 = vmatpush.bf16.msra.mxu0 %v192
    %202 = vmatpush.bf16.msra.mxu0 %v191
    %203 = vmatpush.bf16.msra.mxu0 %v190
    %204 = vmatpush.bf16.msra.mxu0 %v189
    %205 = vmatpush.bf16.msra.mxu0 %v188
    %206 = vmatpush.bf16.msra.mxu0 %v187
    %207 = vmatpush.bf16.msra.mxu0 %v186
    %208 = vmatpush.bf16.msra.mxu0 %v185
    %209 = vmatmul.bf16.gmra.mxu0 %v149
    %v210 = vpop.f32.mrf.mxu0
    %v211 = vadd.f32 %v151, %v210
    %v212 = vpop.f32.mrf.mxu0
    %213 = vdwg.mxu0
    %v214 = vld [vmem:[%s4] sm:$0x3]
    %v215 = vld [vmem:[#allocation5] sm:$0xf]
    %v216 = vld [vmem:[#allocation5 + $0x4] sm:$0xf]
    %v217 = vld [vmem:[#allocation5 + $0x8] sm:$0xf]
    %v218 = vld [vmem:[#allocation5 + $0xc] sm:$0xf]
    %v219 = vld [vmem:[#allocation5 + $0x10] sm:$0xf]
    %v220 = vld [vmem:[#allocation5 + $0x14] sm:$0xf]
    %v221 = vld [vmem:[#allocation5 + $0x18] sm:$0xf]
    %v222 = vld [vmem:[#allocation5 + $0x1c] sm:$0xf]
    %v223 = vld [vmem:[#allocation5 + $0x20] sm:$0xf]
    %v224 = vld [vmem:[#allocation5 + $0x24] sm:$0xf]
    %v225 = vld [vmem:[#allocation5 + $0x28] sm:$0xf]
    %v226 = vld [vmem:[#allocation5 + $0x2c] sm:$0xf]
    %v227 = vld [vmem:[#allocation5 + $0x30] sm:$0xf]
    %v228 = vld [vmem:[#allocation5 + $0x34] sm:$0xf]
    %v229 = vld [vmem:[#allocation5 + $0x38] sm:$0xf]
    %v230 = vld [vmem:[#allocation5 + $0x3c] sm:$0xf]
    %v231 = vld [vmem:[%s6] sm:$0x1]
    %v232 = vrot.slane %v211, 4
    %v233 = vadd.f32 %v211, %v232
    %v234 = vrot.slane %v233, 2
    %v235 = vadd.f32 %v233, %v234
    %v236 = vrot.slane %v235, 1
    %v237 = vadd.f32 %v235, %v236
    %v238 = vmul.f32 %v237, %v114
    %v239 = vmul.f32 %v211, %v211
    %v240 = vrot.slane %v239, 4
    %v241 = vadd.f32 %v239, %v240
    %v242 = vrot.slane %v241, 2
    %v243 = vadd.f32 %v241, %v242
    %v244 = vrot.slane %v243, 1
    %v245 = vadd.f32 %v243, %v244
    %v246 = vmul.f32 %v245, %v114
    %v247 = vmul.f32 %v238, %v238
    %v248 = vsub.f32 %v246, %v247
    %v249 = vmax.f32 %v248, 0.0
    %v250 = vadd.f32 %v249, 1e-05
    %v251 = vrsqrt.pop %v250
    %v252 = vmul.f32 %v251, %v250
    %v253 = vmul.f32 %v252, %v251
    %v254 = vmul.f32 0.5, %v253
    %v255 = vsub.f32 1.5, %v254
    %v256 = vmul.f32 %v251, %v255
    %vm257 = vweird.f32 %v250
    %vm258 = vweird.f32 %v251
    %vm259 = vmor %vm257, %vm258
    %v260 = vsel %vm259, %v251, %v256
    %v261 = vmul.f32 %v214, %v260
    %v262 = vmul.f32 %v238, %v261
    %v264 = vrot.slane %v262, 7
    %v266 = vsub.f32 %v214, %v264
    %v267 = vperm.slane %v261, 0
    %v268 = vmul.f32 %v211, %v267
    %v269 = vperm.slane %v266, 1
    %v270 = vadd.f32 %v268, %v269
    %v271 = vmax.f32 %v270, 0.0
    %v272 = vpack.c.bf16 %v271, %v271
    %v274 = vperm.slane %v231, 0
    %v292 = vunpack.c.l.b16 %v215
    %v293 = vunpack.c.l.b16 %v216
    %v294 = vunpack.c.l.b16 %v217
    %v295 = vunpack.c.l.b16 %v218
    %v296 = vunpack.c.l.b16 %v219
    %v297 = vunpack.c.l.b16 %v220
    %v298 = vunpack.c.l.b16 %v221
    %v299 = vunpack.c.l.b16 %v222
    %v300 = vunpack.c.l.b16 %v223
    %v301 = vunpack.c.l.b16 %v224
    %v302 = vunpack.c.l.b16 %v225
    %v303 = vunpack.c.l.b16 %v226
    %v304 = vunpack.c.l.b16 %v227
    %v305 = vunpack.c.l.b16 %v228
    %v306 = vunpack.c.l.b16 %v229
    %v307 = vunpack.c.l.b16 %v230
    %v308 = vpack.c.b16 %v293, %v292
    %v309 = vpack.c.b16 %v295, %v294
    %v310 = vpack.c.b16 %v297, %v296
    %v311 = vpack.c.b16 %v299, %v298
    %v312 = vpack.c.b16 %v301, %v300
    %v313 = vpack.c.b16 %v303, %v302
    %v314 = vpack.c.b16 %v305, %v304
    %v315 = vpack.c.b16 %v307, %v306
    %324 = vmatpush.bf16.msra.mxu0 %v315
    %325 = vmatpush.bf16.msra.mxu0 %v314
    %326 = vmatpush.bf16.msra.mxu0 %v313
    %327 = vmatpush.bf16.msra.mxu0 %v312
    %328 = vmatpush.bf16.msra.mxu0 %v311
    %329 = vmatpush.bf16.msra.mxu0 %v310
    %330 = vmatpush.bf16.msra.mxu0 %v309
    %331 = vmatpush.bf16.msra.mxu0 %v308
    %332 = vmatmul.bf16.gmra.mxu0 %v272
    %v333 = vpop.f32.mrf.mxu0
    %v334 = vadd.f32 %v274, %v333
    %v335 = vpop.f32.mrf.mxu0
    %336 = vdwg.mxu0
    %v337 = vld [vmem:[%s7] sm:$0x3]
    %v338 = vld [vmem:[#allocation7] sm:$0xf]
    %v339 = vld [vmem:[#allocation7 + $0x4] sm:$0xf]
    %v340 = vld [vmem:[#allocation7 + $0x8] sm:$0xf]
    %v341 = vld [vmem:[#allocation7 + $0xc] sm:$0xf]
    %v342 = vld [vmem:[#allocation7 + $0x10] sm:$0xf]
    %v343 = vld [vmem:[#allocation7 + $0x14] sm:$0xf]
    %v344 = vld [vmem:[#allocation7 + $0x18] sm:$0xf]
    %v345 = vld [vmem:[#allocation7 + $0x1c] sm:$0xf]
    %v346 = vld [vmem:[#allocation7 + $0x20] sm:$0xf]
    %v347 = vld [vmem:[#allocation7 + $0x24] sm:$0xf]
    %v348 = vld [vmem:[#allocation7 + $0x28] sm:$0xf]
    %v349 = vld [vmem:[#allocation7 + $0x2c] sm:$0xf]
    %v350 = vld [vmem:[#allocation7 + $0x30] sm:$0xf]
    %v351 = vld [vmem:[#allocation7 + $0x34] sm:$0xf]
    %v352 = vld [vmem:[#allocation7 + $0x38] sm:$0xf]
    %v353 = vld [vmem:[#allocation7 + $0x3c] sm:$0xf]
    %v354 = vld [vmem:[%s9] sm:$0x1]
    %v355 = vrot.slane %v334, 4
    %v356 = vadd.f32 %v334, %v355
    %v357 = vrot.slane %v356, 2
    %v358 = vadd.f32 %v356, %v357
    %v359 = vrot.slane %v358, 1
    %v360 = vadd.f32 %v358, %v359
    %v361 = vmul.f32 %v360, %v114
    %v362 = vmul.f32 %v334, %v334
    %v363 = vrot.slane %v362, 4
    %v364 = vadd.f32 %v362, %v363
    %v365 = vrot.slane %v364, 2
    %v366 = vadd.f32 %v364, %v365
    %v367 = vrot.slane %v366, 1
    %v368 = vadd.f32 %v366, %v367
    %v369 = vmul.f32 %v368, %v114
    %v370 = vmul.f32 %v361, %v361
    %v371 = vsub.f32 %v369, %v370
    %v372 = vmax.f32 %v371, 0.0
    %v373 = vadd.f32 %v372, 1e-05
    %v374 = vrsqrt.pop %v373
    %v375 = vmul.f32 %v374, %v373
    %v376 = vmul.f32 %v375, %v374
    %v377 = vmul.f32 0.5, %v376
    %v378 = vsub.f32 1.5, %v377
    %v379 = vmul.f32 %v374, %v378
    %vm380 = vweird.f32 %v373
    %vm381 = vweird.f32 %v374
    %vm382 = vmor %vm380, %vm381
    %v383 = vsel %vm382, %v374, %v379
    %v384 = vmul.f32 %v337, %v383
    %v385 = vmul.f32 %v361, %v384
    %v387 = vrot.slane %v385, 7
    %v389 = vsub.f32 %v337, %v387
    %v390 = vperm.slane %v384, 0
    %v391 = vmul.f32 %v334, %v390
    %v392 = vperm.slane %v389, 1
    %v393 = vadd.f32 %v391, %v392
    %v394 = vpack.c.bf16 %v393, %v393
    %v396 = vperm.slane %v354, 0
    %v414 = vunpack.c.l.b16 %v338
    %v415 = vunpack.c.l.b16 %v339
    %v416 = vunpack.c.l.b16 %v340
    %v417 = vunpack.c.l.b16 %v341
    %v418 = vunpack.c.l.b16 %v342
    %v419 = vunpack.c.l.b16 %v343
    %v420 = vunpack.c.l.b16 %v344
    %v421 = vunpack.c.l.b16 %v345
    %v422 = vunpack.c.l.b16 %v346
    %v423 = vunpack.c.l.b16 %v347
    %v424 = vunpack.c.l.b16 %v348
    %v425 = vunpack.c.l.b16 %v349
    %v426 = vunpack.c.l.b16 %v350
    %v427 = vunpack.c.l.b16 %v351
    %v428 = vunpack.c.l.b16 %v352
    %v429 = vunpack.c.l.b16 %v353
    %v430 = vpack.c.b16 %v415, %v414
    %v431 = vpack.c.b16 %v417, %v416
    %v432 = vpack.c.b16 %v419, %v418
    %v433 = vpack.c.b16 %v421, %v420
    %v434 = vpack.c.b16 %v423, %v422
    %v435 = vpack.c.b16 %v425, %v424
    %v436 = vpack.c.b16 %v427, %v426
    %v437 = vpack.c.b16 %v429, %v428
    %446 = vmatpush.bf16.msra.mxu0 %v437
    %447 = vmatpush.bf16.msra.mxu0 %v436
    %448 = vmatpush.bf16.msra.mxu0 %v435
    %449 = vmatpush.bf16.msra.mxu0 %v434
    %450 = vmatpush.bf16.msra.mxu0 %v433
    %451 = vmatpush.bf16.msra.mxu0 %v432
    %452 = vmatpush.bf16.msra.mxu0 %v431
    %453 = vmatpush.bf16.msra.mxu0 %v430
    %454 = vmatmul.bf16.gmra.mxu0 %v394
    %v455 = vpop.f32.mrf.mxu0
    %v456 = vadd.f32 %v396, %v455
    %v457 = vpop.f32.mrf.mxu0
    %458 = vdwg.mxu0
    %459 = vst [vmem:[#allocation8] sm:$0xff] %v456
    // Predicated region
    $region54: #{dnn_forward.1} parent=1 // pred_check
      _
    $region55: #{dnn_forward.1} parent=1 // pred_check_branch
      %461 = sbr.rel (0) target = $region57
    $region56: #{dnn_forward.1} parent=1 // pred_region
      %463 = vsyncadd [#allocation4], 0
      %s465 = sshll.u32 [#allocation8], 4
      %s466 = int_to_ptr.vmem [resolvable:$true] %s465
      %s467 = sshll.u32 %s10, 4
      %s468 = int_to_ptr.hbm [resolvable:$true] %s467
      %470 = dma.vmem_to_hbm [thread:$0]  %s466, 128, %s468, [#allocation4]
    $region57: #{dnn_forward.1} parent=1 // pred_fallthru
      _
    // Predicated region
    $region58: #{dnn_forward.1} parent=1 // pred_check
      _
    $region59: #{dnn_forward.1} parent=1 // pred_check_branch
      %472 = sbr.rel (0) target = $region61
    $region60: #{dnn_forward.1} parent=1 // pred_region
      %474 = dma.done [#allocation4], 128
    $region61: #{dnn_forward.1} parent=1 // pred_fallthru
      _
    %475 = vsyncpa [#allocation3], 1
    %476 = vsyncpa [#allocation6], 1
    %477 = vsyncpa [#allocation4], 1

</llo_original>
